<compile_context>
chip_gen: v7x
topology: tpu7x:2x2x1
jax: 0.10.0
libtpu: 0.0.40
codegen_flags: <defaults>
</compile_context>

<pallas_src>
import functools

import jax
import jax.numpy as jnp
import numpy as np
from jax.experimental import pallas as pl
from jax.experimental.pallas import tpu as pltpu


def _round_up(x, m):
    return ((x + m - 1) // m) * m


def _protonet_kernel(sup_ref, qry_ref, avg_ref, onehot_ref, bias_ref,
                     ypred_ref, loss_ref, *, n_shot, num_query):
    """One grid step = one few-shot episode.

    sup_ref    : (1, nk_p, d_p)  bf16  zero-padded support embeddings
    qry_ref    : (1, q_p,  d_p)  bf16  zero-padded query embeddings
    avg_ref    : (k_p, nk_p)     bf16  0/1 class-membership mask (shared)
    onehot_ref : (1, q_p, k_p)   f32   one-hot query labels (0 on padding)
    bias_ref   : (1, k_p)        f32   0 for real classes, -1e30 for padding
    ypred_ref  : (1, q_p, k_p)   f32   softmax(-dist)              (output)
    loss_ref   : (1, 1, 1)       f32   NLLLoss(log_softmax, label) (output)
    """
    support = sup_ref[0]                                       # (nk_p, d_p) bf16
    queries_lo = qry_ref[0]                                    # (q_p,  d_p) bf16

    # Prototypes: per-class sum via the MXU (0/1 mask), then scale by 1/n.
    # Scale kept in-kernel / f32 so 1/n is exact (e.g. n=3 is not bf16-exact).
    proto = jnp.dot(avg_ref[...], support,
                    preferred_element_type=jnp.float32)        # (k_p, d_p) f32
    proto = proto * jnp.float32(1.0 / n_shot)

    # Pairwise Euclidean distance:  ||q - p||^2 = ||q||^2 + ||p||^2 - 2 q.p
    # (padded feature columns are zero, so the norms are unaffected).
    queries = queries_lo.astype(jnp.float32)
    q_sq = jnp.sum(queries * queries, axis=1, keepdims=True)   # (q_p, 1)
    p_sq = jnp.sum(proto * proto, axis=1, keepdims=True)       # (k_p, 1)
    qp = jax.lax.dot_general(                                  # (q_p, k_p)
        queries_lo, proto.astype(jnp.bfloat16),
        dimension_numbers=(((1,), (1,)), ((), ())),
        preferred_element_type=jnp.float32)
    d2 = q_sq + p_sq.T - 2.0 * qp
    dist = jnp.sqrt(jnp.maximum(d2, 0.0))

    # softmax / log_softmax over classes; padded classes carry a -1e30 bias.
    logits = bias_ref[...] - dist                              # (q_p, k_p)
    m = jnp.max(logits, axis=1, keepdims=True)
    e = jnp.exp(logits - m)
    s = jnp.sum(e, axis=1, keepdims=True)
    ypred_ref[0] = e * pl.reciprocal(s, approx=True)           # prob path only
    log_p = (logits - m) - jnp.log(s)                          # exact log path

    # NLLLoss, mean over the real queries (padded rows/cols have zero one-hot).
    loss = -jnp.sum(log_p * onehot_ref[0]) * jnp.float32(1.0 / num_query)
    loss_ref[...] = loss.reshape(1, 1, 1)


def protonet_forward_batched(support, queries, query_labels, *,
                             k_way, n_shot, query):
    """Batched ProtoNet forward over B independent episodes.

    support      : (B, k_way*n_shot, d)
    queries      : (B, k_way*query,  d)
    query_labels : (B, k_way*query)  int  (== label[1] in the torch module)
    Returns (y_pred (B, k_way*query, k_way) f32, loss (B,) f32).
    """
    B, nk, d = support.shape
    q = k_way * query
    assert nk == k_way * n_shot, (nk, k_way, n_shot)
    assert queries.shape == (B, q, d), (queries.shape, (B, q, d))
    assert query_labels.shape == (B, q), (query_labels.shape, (B, q))

    # Tile-friendly padded sizes: feature (MXU K) dim -> x128, class dim ->
    # x128 (lane-dense y_pred, full-width MXU N), bf16 sublane dims -> x16.
    d_p = _round_up(d, 128)
    k_p = _round_up(k_way, 128)
    nk_p = _round_up(nk, 16)
    q_p = _round_up(q, 16)

    sup_p = jnp.pad(support.astype(jnp.bfloat16),
                    ((0, 0), (0, nk_p - nk), (0, d_p - d)))
    qry_p = jnp.pad(queries.astype(jnp.bfloat16),
                    ((0, 0), (0, q_p - q), (0, d_p - d)))

    # Hoisted 0/1 prototype-averaging mask (shared across episodes).
    sup_idx = jnp.arange(nk_p)
    cls_idx = jnp.arange(k_p)
    avg01 = ((sup_idx[None, :] // n_shot) == cls_idx[:, None]) \
        & (sup_idx[None, :] < nk)
    avg01 = avg01.astype(jnp.bfloat16)                          # (k_p, nk_p)

    # Hoisted one-hot labels (zeros on padded rows / padded classes).
    onehot = jax.nn.one_hot(query_labels.astype(jnp.int32), k_p,
                            dtype=jnp.float32)                  # (B, q, k_p)
    onehot = jnp.pad(onehot, ((0, 0), (0, q_p - q), (0, 0)))

    # Class-validity bias: padded classes are pushed out of the softmax.
    bias = jnp.where(jnp.arange(k_p) < k_way, 0.0, -1e30)
    bias = bias.astype(jnp.float32)[None, :]                    # (1, k_p)

    kernel = functools.partial(_protonet_kernel, n_shot=n_shot, num_query=q)

    y_pred_p, loss_p = pl.pallas_call(
        kernel,
        out_shape=(
            jax.ShapeDtypeStruct((B, q_p, k_p), jnp.float32),
            jax.ShapeDtypeStruct((B, 1, 1), jnp.float32),
        ),
        grid_spec=pl.GridSpec(
            grid=(B,),
            in_specs=[
                pl.BlockSpec((1, nk_p, d_p), lambda b: (b, 0, 0)),
                pl.BlockSpec((1, q_p, d_p), lambda b: (b, 0, 0)),
                pl.BlockSpec((k_p, nk_p), lambda b: (0, 0)),
                pl.BlockSpec((1, q_p, k_p), lambda b: (b, 0, 0)),
                pl.BlockSpec((1, k_p), lambda b: (0, 0)),
            ],
            out_specs=[
                pl.BlockSpec((1, q_p, k_p), lambda b: (b, 0, 0)),
                pl.BlockSpec((1, 1, 1), lambda b: (b, 0, 0)),
            ],
        ),
        compiler_params=pltpu.CompilerParams(
            dimension_semantics=("parallel",)),   # episodes shard over TCs
    )(sup_p, qry_p, avg01, onehot, bias)

    return y_pred_p[:, :q, :k_way], loss_p[:, 0, 0]


def protonet_forward(feat, query_labels, *, k_way, n_shot, query):
    """Single-episode API mirroring ProtoNet.forward(feat, label) with
    label[1] == query_labels. Returns (y_pred (q, k_way), scalar loss)."""
    nk = k_way * n_shot
    y_pred, loss = protonet_forward_batched(
        feat[None, :nk, :], feat[None, nk:, :], query_labels[None, :],
        k_way=k_way, n_shot=n_shot, query=query)
    return y_pred[0], loss[0]


def _reference_episode(feat, labels, k, n, query):
    """Pure-JAX f32 reference on the bf16-quantized inputs."""
    feat = feat.astype(jnp.bfloat16).astype(jnp.float32)
    nk = k * n
    support, queries = feat[:nk], feat[nk:]
    proto = support.reshape(k, n, -1).mean(axis=1)
    diff = queries[:, None, :] - proto[None, :, :]
    dist = jnp.sqrt(jnp.sum(diff * diff, axis=-1))
    y = jax.nn.softmax(-dist, axis=1)
    log_p = jax.nn.log_softmax(-dist, axis=1)
    loss = -jnp.mean(log_p[jnp.arange(queries.shape[0]), labels])
    return y, loss


if __name__ == "__main__":
    # 2 episodes of a 4-way / 2-shot / 3-query task with 64-dim features.
    EPISODES, K_WAY, N_SHOT, QUERY, DIM = 2, 4, 2, 3, 64
    NK = K_WAY * N_SHOT            # 8 support rows per episode
    Q = K_WAY * QUERY              # 12 query rows per episode

    key = jax.random.PRNGKey(0)
    feats = jax.random.normal(key, (EPISODES, NK + Q, DIM), dtype=jnp.float32)
    labels = jnp.tile(
        jnp.repeat(jnp.arange(K_WAY, dtype=jnp.int32), QUERY)[None, :],
        (EPISODES, 1))

    # Batched path: one pallas_call, episode axis parallel over TensorCores.
    y_pred, loss = protonet_forward_batched(
        feats[:, :NK], feats[:, NK:], labels,
        k_way=K_WAY, n_shot=N_SHOT, query=QUERY)
    jax.block_until_ready((y_pred, loss))

    assert y_pred.shape == (EPISODES, Q, K_WAY)
    assert loss.shape == (EPISODES,)

    # Single-episode API (matches the torch module's forward signature).
    y_pred0, loss0 = protonet_forward(
        feats[0], labels[0], k_way=K_WAY, n_shot=N_SHOT, query=QUERY)
    jax.block_until_ready((y_pred0, loss0))

    # Numerical check against a pure-JAX reference (bf16-quantized inputs).
    for b in range(EPISODES):
        y_ref, l_ref = _reference_episode(feats[b], labels[b],
                                          K_WAY, N_SHOT, QUERY)
        np.testing.assert_allclose(np.asarray(y_pred[b]), np.asarray(y_ref),
                                   rtol=2e-2, atol=2e-2)
        np.testing.assert_allclose(float(loss[b]), float(l_ref),
                                   rtol=2e-2, atol=2e-2)
    np.testing.assert_allclose(np.asarray(y_pred0), np.asarray(y_pred[0]),
                               rtol=1e-5, atol=1e-5)
    np.testing.assert_allclose(float(loss0), float(loss[0]),
                               rtol=1e-5, atol=1e-5)

    print("KERNEL_OK")
</pallas_src>

<mosaic_0001>
module attributes {stable_mosaic.version = 11 : i64} {
  func.func @_protonet_kernel(%arg0: i32, %arg1: memref<1x16x128xbf16, #tpu.memory_space<vmem>>, %arg2: memref<1x16x128xbf16, #tpu.memory_space<vmem>>, %arg3: memref<128x16xbf16, #tpu.memory_space<vmem>>, %arg4: memref<1x16x128xf32, #tpu.memory_space<vmem>>, %arg5: memref<1x128xf32, #tpu.memory_space<vmem>>, %arg6: memref<1x16x128xf32, #tpu.memory_space<vmem>>, %arg7: memref<1x1x1xf32, #tpu.memory_space<vmem>>) attributes {dimension_semantics = [#tpu.dimension_semantics<parallel>], iteration_bounds = array<i64: 2>, scalar_prefetch = 0 : i64, scratch_operands = 0 : i64, tpu.core_type = #tpu.core_type<tc>, window_params = [{transform_indices = @transform_0, window_bounds = array<i64: 1, 16, 128>}, {transform_indices = @transform_1, window_bounds = array<i64: 1, 16, 128>}, {pipeline_mode = #tpu.pipeline_mode<synchronous>, transform_indices = @transform_2, window_bounds = array<i64: 128, 16>}, {transform_indices = @transform_3, window_bounds = array<i64: 1, 16, 128>}, {pipeline_mode = #tpu.pipeline_mode<synchronous>, transform_indices = @transform_4, window_bounds = array<i64: 1, 128>}, {transform_indices = @transform_5, window_bounds = array<i64: 1, 16, 128>}, {transform_indices = @transform_6, window_bounds = array<i64: 1, 1, 1>}]} {
    %c0 = arith.constant 0 : index
    %c0_0 = arith.constant 0 : index
    %c0_1 = arith.constant 0 : index
    %0 = vector.load %arg1[%c0, %c0_0, %c0_1] : memref<1x16x128xbf16, #tpu.memory_space<vmem>>, vector<1x16x128xbf16>
    %1 = vector.shape_cast %0 : vector<1x16x128xbf16> to vector<16x128xbf16>
    %c0_2 = arith.constant 0 : index
    %c0_3 = arith.constant 0 : index
    %c0_4 = arith.constant 0 : index
    %2 = vector.load %arg2[%c0_2, %c0_3, %c0_4] : memref<1x16x128xbf16, #tpu.memory_space<vmem>>, vector<1x16x128xbf16>
    %3 = vector.shape_cast %2 : vector<1x16x128xbf16> to vector<16x128xbf16>
    %c0_5 = arith.constant 0 : index
    %c0_6 = arith.constant 0 : index
    %4 = vector.load %arg3[%c0_5, %c0_6] : memref<128x16xbf16, #tpu.memory_space<vmem>>, vector<128x16xbf16>
    %cst = arith.constant dense<0.000000e+00> : vector<128x128xf32>
    %5 = tpu.matmul %4, %1, %cst {dimension_numbers = #tpu.dot_dimension_numbers<[1], [0], [0], [1], [0, 0, 1, 1], [], []>} : vector<128x16xbf16>, vector<16x128xbf16>, vector<128x128xf32> -> vector<128x128xf32>
    %cst_7 = arith.constant 5.000000e-01 : f32
    %6 = vector.broadcast %cst_7 : f32 to vector<128x128xf32>
    %7 = arith.mulf %5, %6 : vector<128x128xf32>
    %8 = arith.extf %3 : vector<16x128xbf16> to vector<16x128xf32>
    %9 = arith.mulf %8, %8 : vector<16x128xf32>
    %cst_8 = arith.constant dense<0.000000e+00> : vector<16xf32>
    %10 = vector.multi_reduction <add>, %9, %cst_8 [1] : vector<16x128xf32> to vector<16xf32>
    %11 = vector.shape_cast %10 : vector<16xf32> to vector<16x1xf32>
    %12 = arith.mulf %7, %7 : vector<128x128xf32>
    %cst_9 = arith.constant dense<0.000000e+00> : vector<128xf32>
    %13 = vector.multi_reduction <add>, %12, %cst_9 [1] : vector<128x128xf32> to vector<128xf32>
    %14 = vector.shape_cast %13 : vector<128xf32> to vector<128x1xf32>
    %15 = arith.truncf %7 : vector<128x128xf32> to vector<128x128xbf16>
    %cst_10 = arith.constant dense<0.000000e+00> : vector<16x128xf32>
    %16 = tpu.matmul %3, %15, %cst_10 {dimension_numbers = #tpu.dot_dimension_numbers<[1], [1], [0], [0], [0, 0, 1, 0], [], []>} : vector<16x128xbf16>, vector<128x128xbf16>, vector<16x128xf32> -> vector<16x128xf32>
    %17 = tpu.transpose %14, [1, 0] : vector<128x1xf32> -> vector<1x128xf32>
    %18 = vector.broadcast %11 : vector<16x1xf32> to vector<16x128xf32>
    %19 = vector.broadcast %17 : vector<1x128xf32> to vector<16x128xf32>
    %20 = arith.addf %18, %19 : vector<16x128xf32>
    %cst_11 = arith.constant 2.000000e+00 : f32
    %21 = vector.broadcast %cst_11 : f32 to vector<16x128xf32>
    %22 = arith.mulf %21, %16 : vector<16x128xf32>
    %23 = arith.subf %20, %22 : vector<16x128xf32>
    %cst_12 = arith.constant 0.000000e+00 : f32
    %24 = vector.broadcast %cst_12 : f32 to vector<16x128xf32>
    %25 = arith.maximumf %23, %24 : vector<16x128xf32>
    %26 = math.sqrt %25 : vector<16x128xf32>
    %c0_13 = arith.constant 0 : index
    %c0_14 = arith.constant 0 : index
    %27 = vector.load %arg5[%c0_13, %c0_14] : memref<1x128xf32, #tpu.memory_space<vmem>>, vector<1x128xf32>
    %28 = vector.broadcast %27 : vector<1x128xf32> to vector<16x128xf32>
    %29 = arith.subf %28, %26 : vector<16x128xf32>
    %cst_15 = arith.constant dense<0xFF800000> : vector<16xf32>
    %30 = vector.multi_reduction <maximumf>, %29, %cst_15 [1] : vector<16x128xf32> to vector<16xf32>
    %31 = vector.shape_cast %30 : vector<16xf32> to vector<16x1xf32>
    %32 = vector.broadcast %31 : vector<16x1xf32> to vector<16x128xf32>
    %33 = arith.subf %29, %32 : vector<16x128xf32>
    %34 = math.exp %33 : vector<16x128xf32>
    %cst_16 = arith.constant dense<0.000000e+00> : vector<16xf32>
    %35 = vector.multi_reduction <add>, %34, %cst_16 [1] : vector<16x128xf32> to vector<16xf32>
    %36 = vector.shape_cast %35 : vector<16xf32> to vector<16x1xf32>
    %37 = tpu.reciprocal %36 {approx = true} : vector<16x1xf32> -> vector<16x1xf32>
    %38 = vector.broadcast %37 : vector<16x1xf32> to vector<16x128xf32>
    %39 = arith.mulf %34, %38 : vector<16x128xf32>
    %c0_17 = arith.constant 0 : index
    %c0_18 = arith.constant 0 : index
    %c0_19 = arith.constant 0 : index
    %40 = vector.load %arg6[%c0_17, %c0_18, %c0_19] : memref<1x16x128xf32, #tpu.memory_space<vmem>>, vector<1x16x128xf32>
    %41 = vector.shape_cast %40 : vector<1x16x128xf32> to vector<16x128xf32>
    %42 = vector.shape_cast %39 : vector<16x128xf32> to vector<1x16x128xf32>
    tpu.vector_store %arg6[%c0_17, %c0_18, %c0_19], %42 {strides = array<i32>} : memref<1x16x128xf32, #tpu.memory_space<vmem>>, vector<1x16x128xf32>,
    %43 = vector.broadcast %31 : vector<16x1xf32> to vector<16x128xf32>
    %44 = arith.subf %29, %43 : vector<16x128xf32>
    %45 = math.log %36 : vector<16x1xf32>
    %46 = vector.broadcast %45 : vector<16x1xf32> to vector<16x128xf32>
    %47 = arith.subf %44, %46 : vector<16x128xf32>
    %c0_20 = arith.constant 0 : index
    %c0_21 = arith.constant 0 : index
    %c0_22 = arith.constant 0 : index
    %48 = vector.load %arg4[%c0_20, %c0_21, %c0_22] : memref<1x16x128xf32, #tpu.memory_space<vmem>>, vector<1x16x128xf32>
    %49 = vector.shape_cast %48 : vector<1x16x128xf32> to vector<16x128xf32>
    %50 = arith.mulf %47, %49 : vector<16x128xf32>
    %51 = vector.shape_cast %50 : vector<16x128xf32> to vector<1x16x128xf32>
    %cst_23 = arith.constant dense<0.000000e+00> : vector<1xf32>
    %52 = vector.multi_reduction <add>, %51, %cst_23 [1, 2] : vector<1x16x128xf32> to vector<1xf32>
    %53 = vector.shape_cast %52 : vector<1xf32> to vector<1x1x1xf32>
    %54 = vector.extract %53[0, 0, 0] : f32 from vector<1x1x1xf32>
    %cst_24 = arith.constant 0.000000e+00 : f32
    %55 = arith.subf %cst_24, %54 : f32
    %cst_25 = arith.constant 0.0833333358 : f32
    %56 = arith.mulf %55, %cst_25 : f32
    %57 = vector.broadcast %56 : f32 to vector<1x1x1xf32>
    %c0_26 = arith.constant 0 : index
    %c0_27 = arith.constant 0 : index
    %c0_28 = arith.constant 0 : index
    %58 = vector.load %arg7[%c0_26, %c0_27, %c0_28] : memref<1x1x1xf32, #tpu.memory_space<vmem>>, vector<1x1x1xf32>
    tpu.vector_store %arg7[%c0_26, %c0_27, %c0_28], %57 {strides = array<i32>} : memref<1x1x1xf32, #tpu.memory_space<vmem>>, vector<1x1x1xf32>,
    return
  }
  func.func @transform_0(%arg0: i32) -> (i32, i32, i32) {
    %c0_i32 = arith.constant 0 : i32
    %c0_i32_0 = arith.constant 0 : i32
    %c0_i32_1 = arith.constant 0 : i32
    return %arg0, %c0_i32, %c0_i32_0 : i32, i32, i32
  }
  func.func @transform_1(%arg0: i32) -> (i32, i32, i32) {
    %c0_i32 = arith.constant 0 : i32
    %c0_i32_0 = arith.constant 0 : i32
    %c0_i32_1 = arith.constant 0 : i32
    return %arg0, %c0_i32, %c0_i32_0 : i32, i32, i32
  }
  func.func @transform_2(%arg0: i32) -> (i32, i32) {
    %c0_i32 = arith.constant 0 : i32
    %c0_i32_0 = arith.constant 0 : i32
    %c0_i32_1 = arith.constant 0 : i32
    return %c0_i32, %c0_i32_0 : i32, i32
  }
  func.func @transform_3(%arg0: i32) -> (i32, i32, i32) {
    %c0_i32 = arith.constant 0 : i32
    %c0_i32_0 = arith.constant 0 : i32
    %c0_i32_1 = arith.constant 0 : i32
    return %arg0, %c0_i32, %c0_i32_0 : i32, i32, i32
  }
  func.func @transform_4(%arg0: i32) -> (i32, i32) {
    %c0_i32 = arith.constant 0 : i32
    %c0_i32_0 = arith.constant 0 : i32
    %c0_i32_1 = arith.constant 0 : i32
    return %c0_i32, %c0_i32_0 : i32, i32
  }
  func.func @transform_5(%arg0: i32) -> (i32, i32, i32) {
    %c0_i32 = arith.constant 0 : i32
    %c0_i32_0 = arith.constant 0 : i32
    %c0_i32_1 = arith.constant 0 : i32
    return %arg0, %c0_i32, %c0_i32_0 : i32, i32, i32
  }
  func.func @transform_6(%arg0: i32) -> (i32, i32, i32) {
    %c0_i32 = arith.constant 0 : i32
    %c0_i32_0 = arith.constant 0 : i32
    %c0_i32_1 = arith.constant 0 : i32
    return %arg0, %c0_i32, %c0_i32_0 : i32, i32, i32
  }
}

</mosaic_0001>

<llo_original>
// kernel: tpu_custom_call.1
$region0: #{tpu_custom_call.1}
  #allocation0 [shape = 'u32[]', space=smem, size = 0x4, offset = 0x4, fixed_abs, tag = 'smem constant byte address 0x4 - core index']
  #allocation1 [shape = 'u32[144,128]{1,0:T(1,128)}', space=vmem, size = 0x12000, scoped, tag = 'internal scratch']
  %s0 = inlined_call_operand.vmem [shape: bf16[2,16,128], index: 0, kind: input, shape index: {}]
  %s1 = inlined_call_operand.vmem [shape: bf16[2,16,128], index: 1, kind: input, shape index: {}]
  %s2 = inlined_call_operand.vmem [shape: bf16[128,16], index: 2, kind: input, shape index: {}]
  %s3 = inlined_call_operand.vmem [shape: f32[2,16,128], index: 3, kind: input, shape index: {}]
  %s4 = inlined_call_operand.vmem [shape: f32[1,128], index: 4, kind: input, shape index: {}]
  %s5 = inlined_call_operand.hbm [shape: f32[2,16,128], index: 5, kind: output, shape index: {0}]
  %s6 = inlined_call_operand.vmem [shape: f32[2,1,1], index: 6, kind: output, shape index: {1}]
  %7 = xla_tuple %s5, %s6
  %s8 = sld [smem:[#allocation0]]
  $region61: #{tpu_custom_call.1} parent=0
    _
  %s10 = ssub.s32 1, %s8
  %s11 = scalar_select 0, %s10, %s8
  $region1: #{tpu_custom_call.1} parent=0
    #allocation2 [shape = 'u8[16384]{0}', space=vmem, size = 0x4000, scoped, tag = 'output window, operand 0']
    #allocation3 [shape = 's32[2]{0}', space=sflag, size = 0x8, scoped, tag = 'scoped memory for tpu_custom_call.1']
    %12 = vsyncpa [#allocation3], 0
    %s13 = scalar_lea.sflag [#allocation3], 1
    %14 = vsyncpa %s13, 0
    loop: start=0, step=1, limit=4
    $region2: #{tpu_custom_call.1} parent=1 // loop_pre_header
      _
    $region3: #{tpu_custom_call.1} parent=1 // loop_header
      %s16 = sphi 0, %s20
      %p17 = scmp.ge.s32.totalorder %s16, 4
      %s26 = sphi 0, %s28
      %s29 = sphi 0, %s26
      %s30 = sphi 0, %s29
      %s46 = sphi 0, %s30
      %s52 = sphi 0, %s54
      %s55 = sphi 0, %s52
      %s56 = sphi 0, %s55
      %s72 = sphi 0, %s56
      %s76 = sphi 0, %s76
      %s78 = sphi 0, %s76
      %s79 = sphi 0, %s78
      %s93 = sphi 0, %s79
      %s99 = sphi 0, %s101
      %s102 = sphi 0, %s99
      %s103 = sphi 0, %s102
      %s119 = sphi 0, %s103
      %s123 = sphi 0, %s123
      %s125 = sphi 0, %s123
      %s126 = sphi 0, %s125
      %s140 = sphi 0, %s126
      %s146 = sphi 0, %s148
      %s149 = sphi 0, %s146
      %s150 = sphi 0, %s149
      %s166 = sphi 0, %s150
      %s172 = sphi 0, %s174
      %s175 = sphi 0, %s172
      %s176 = sphi 0, %s175
      %s192 = sphi 0, %s176
    $region4: #{tpu_custom_call.1} parent=1 // loop_header_branch
      %19 = sbr.rel (%p17) target = $region8
    $region5: #{tpu_custom_call.1} parent=1 // loop_body
      %s21 = ssub.s32 %s16, 1
      %s22 = ssub.s32 %s16, 2
      %s23 = sadd.s32 %s16, 1
      %s24 = ssub.s32 %s16, %s23
      %p25 = scmp.eq.s32.totalorder %s24, 0
      %s27 = sadd.s32 %s26, 1
      %s28 = scalar_select %p25, %s26, %s27
      %p31 = pneg %p25
      %p32 = scmp.eq.s32.totalorder %s16, 1
      %p33 = por %p31, %p32
      %p34 = scmp.ne.s32.totalorder %s26, %s29
      %p35 = scmp.eq.s32.totalorder %s16, 0
      %p36 = por %p34, %p35
      %p37 = scmp.ne.s32.totalorder %s26, %s29
      %p38 = scmp.eq.s32.totalorder %s21, 1
      %p39 = por %p37, %p38
      %p40 = scmp.ne.s32.totalorder %s29, %s30
      %p41 = scmp.eq.s32.totalorder %s21, 0
      %p42 = por %p40, %p41
      %p43 = scmp.ne.s32.totalorder %s29, %s30
      %p44 = scmp.eq.s32.totalorder %s22, 1
      %p45 = por %p43, %p44
      %p47 = scmp.ne.s32.totalorder %s30, %s46
      %p48 = scmp.eq.s32.totalorder %s22, 0
      %p49 = por %p47, %p48
      %s50 = ssub.s32 %s16, %s23
      %p51 = scmp.eq.s32.totalorder %s50, 0
      %s53 = sadd.s32 %s52, 1
      %s54 = scalar_select %p51, %s52, %s53
      %p57 = pneg %p51
      %p58 = scmp.eq.s32.totalorder %s16, 1
      %p59 = por %p57, %p58
      %p60 = scmp.ne.s32.totalorder %s52, %s55
      %p61 = scmp.eq.s32.totalorder %s16, 0
      %p62 = por %p60, %p61
      %p63 = scmp.ne.s32.totalorder %s52, %s55
      %p64 = scmp.eq.s32.totalorder %s21, 1
      %p65 = por %p63, %p64
      %p66 = scmp.ne.s32.totalorder %s55, %s56
      %p67 = scmp.eq.s32.totalorder %s21, 0
      %p68 = por %p66, %p67
      %p69 = scmp.ne.s32.totalorder %s55, %s56
      %p70 = scmp.eq.s32.totalorder %s22, 1
      %p71 = por %p69, %p70
      %p73 = scmp.ne.s32.totalorder %s56, %s72
      %p74 = scmp.eq.s32.totalorder %s22, 0
      %p75 = por %p73, %p74
      %s77 = sadd.s32 %s76, 1
      %p80 = scmp.eq.s32.totalorder %s16, 1
      %p81 = scmp.ne.s32.totalorder %s76, %s78
      %p82 = scmp.eq.s32.totalorder %s16, 0
      %p83 = por %p81, %p82
      %p84 = scmp.ne.s32.totalorder %s76, %s78
      %p85 = scmp.eq.s32.totalorder %s21, 1
      %p86 = por %p84, %p85
      %p87 = scmp.ne.s32.totalorder %s78, %s79
      %p88 = scmp.eq.s32.totalorder %s21, 0
      %p89 = por %p87, %p88
      %p90 = scmp.ne.s32.totalorder %s78, %s79
      %p91 = scmp.eq.s32.totalorder %s22, 1
      %p92 = por %p90, %p91
      %p94 = scmp.ne.s32.totalorder %s79, %s93
      %p95 = scmp.eq.s32.totalorder %s22, 0
      %p96 = por %p94, %p95
      %s97 = ssub.s32 %s16, %s23
      %p98 = scmp.eq.s32.totalorder %s97, 0
      %s100 = sadd.s32 %s99, 1
      %s101 = scalar_select %p98, %s99, %s100
      %p104 = pneg %p98
      %p105 = scmp.eq.s32.totalorder %s16, 1
      %p106 = por %p104, %p105
      %p107 = scmp.ne.s32.totalorder %s99, %s102
      %p108 = scmp.eq.s32.totalorder %s16, 0
      %p109 = por %p107, %p108
      %p110 = scmp.ne.s32.totalorder %s99, %s102
      %p111 = scmp.eq.s32.totalorder %s21, 1
      %p112 = por %p110, %p111
      %p113 = scmp.ne.s32.totalorder %s102, %s103
      %p114 = scmp.eq.s32.totalorder %s21, 0
      %p115 = por %p113, %p114
      %p116 = scmp.ne.s32.totalorder %s102, %s103
      %p117 = scmp.eq.s32.totalorder %s22, 1
      %p118 = por %p116, %p117
      %p120 = scmp.ne.s32.totalorder %s103, %s119
      %p121 = scmp.eq.s32.totalorder %s22, 0
      %p122 = por %p120, %p121
      %s124 = sadd.s32 %s123, 1
      %p127 = scmp.eq.s32.totalorder %s16, 1
      %p128 = scmp.ne.s32.totalorder %s123, %s125
      %p129 = scmp.eq.s32.totalorder %s16, 0
      %p130 = por %p128, %p129
      %p131 = scmp.ne.s32.totalorder %s123, %s125
      %p132 = scmp.eq.s32.totalorder %s21, 1
      %p133 = por %p131, %p132
      %p134 = scmp.ne.s32.totalorder %s125, %s126
      %p135 = scmp.eq.s32.totalorder %s21, 0
      %p136 = por %p134, %p135
      %p137 = scmp.ne.s32.totalorder %s125, %s126
      %p138 = scmp.eq.s32.totalorder %s22, 1
      %p139 = por %p137, %p138
      %p141 = scmp.ne.s32.totalorder %s126, %s140
      %p142 = scmp.eq.s32.totalorder %s22, 0
      %p143 = por %p141, %p142
      %s144 = ssub.s32 %s16, %s23
      %p145 = scmp.eq.s32.totalorder %s144, 0
      %s147 = sadd.s32 %s146, 1
      %s148 = scalar_select %p145, %s146, %s147
      %p151 = pneg %p145
      %p152 = scmp.eq.s32.totalorder %s16, 1
      %p153 = por %p151, %p152
      %p154 = scmp.ne.s32.totalorder %s146, %s149
      %p155 = scmp.eq.s32.totalorder %s16, 0
      %p156 = por %p154, %p155
      %p157 = scmp.ne.s32.totalorder %s146, %s149
      %p158 = scmp.eq.s32.totalorder %s21, 1
      %p159 = por %p157, %p158
      %p160 = scmp.ne.s32.totalorder %s149, %s150
      %p161 = scmp.eq.s32.totalorder %s21, 0
      %p162 = por %p160, %p161
      %p163 = scmp.ne.s32.totalorder %s149, %s150
      %p164 = scmp.eq.s32.totalorder %s22, 1
      %p165 = por %p163, %p164
      %p167 = scmp.ne.s32.totalorder %s150, %s166
      %p168 = scmp.eq.s32.totalorder %s22, 0
      %p169 = por %p167, %p168
      %s170 = ssub.s32 %s16, %s23
      %p171 = scmp.eq.s32.totalorder %s170, 0
      %s173 = sadd.s32 %s172, 1
      %s174 = scalar_select %p171, %s172, %s173
      %p177 = pneg %p171
      %p178 = scmp.eq.s32.totalorder %s16, 1
      %p179 = por %p177, %p178
      %p180 = scmp.ne.s32.totalorder %s172, %s175
      %p181 = scmp.eq.s32.totalorder %s16, 0
      %p182 = por %p180, %p181
      %p183 = scmp.ne.s32.totalorder %s172, %s175
      %p184 = scmp.eq.s32.totalorder %s21, 1
      %p185 = por %p183, %p184
      %p186 = scmp.ne.s32.totalorder %s175, %s176
      %p187 = scmp.eq.s32.totalorder %s21, 0
      %p188 = por %p186, %p187
      %p189 = scmp.ne.s32.totalorder %s175, %s176
      %p190 = scmp.eq.s32.totalorder %s22, 1
      %p191 = por %p189, %p190
      %p193 = scmp.ne.s32.totalorder %s176, %s192
      %p194 = scmp.eq.s32.totalorder %s22, 0
      %p195 = por %p193, %p194
      %p196 = scmp.le.s32.totalorder 1, %s16
      %p197 = scmp.lt.s32.totalorder %s16, 3
      %p198 = pnand %p196, %p197
      %p199 = pneg %p198
      // Predicated region
      $region9: #{tpu_custom_call.1} parent=5 // pred_check
        _
      $region10: #{tpu_custom_call.1} parent=5 // pred_check_branch
        %201 = sbr.rel (%p198) target = $region12
      $region11: #{tpu_custom_call.1} parent=5 // pred_region
        %s202 = ssub.s32 %s16, 1
        // Predicated region
        $region13: #{tpu_custom_call.1} parent=11 // pred_check
          %p203 = pneg %p89
        $region14: #{tpu_custom_call.1} parent=11 // pred_check_branch
          %205 = sbr.rel (%p203) target = $region16
        $region15: #{tpu_custom_call.1} parent=11 // pred_region
          _
        $region16: #{tpu_custom_call.1} parent=11 // pred_fallthru
          _
        // Predicated region
        $region17: #{tpu_custom_call.1} parent=11 // pred_check
          %p206 = pneg %p136
        $region18: #{tpu_custom_call.1} parent=11 // pred_check_branch
          %208 = sbr.rel (%p206) target = $region20
        $region19: #{tpu_custom_call.1} parent=11 // pred_region
          _
        $region20: #{tpu_custom_call.1} parent=11 // pred_fallthru
          _
      $region12: #{tpu_custom_call.1} parent=5 // pred_fallthru
        _
      %p209 = scmp.lt.s32.totalorder %s16, 2
      // Predicated region
      $region21: #{tpu_custom_call.1} parent=5 // pred_check
        %p210 = pneg %p209
      $region22: #{tpu_custom_call.1} parent=5 // pred_check_branch
        %212 = sbr.rel (%p210) target = $region24
      $region23: #{tpu_custom_call.1} parent=5 // pred_region
        // Predicated region
        $region25: #{tpu_custom_call.1} parent=23 // pred_check
          %p213 = pneg %p36
        $region26: #{tpu_custom_call.1} parent=23 // pred_check_branch
          %215 = sbr.rel (%p213) target = $region28
        $region27: #{tpu_custom_call.1} parent=23 // pred_region
          %p216 = scmp.lt.s32.totalorder %s16, 1
          %s217 = scalar_select %p216, %s16, 1
          %s218 = smul.addr %s217, 2
          %s219 = smul.addr %s218, 4
          %s220 = scalar_lea.vmem %s0, %s219
        $region28: #{tpu_custom_call.1} parent=23 // pred_fallthru
          _
        // Predicated region
        $region29: #{tpu_custom_call.1} parent=23 // pred_check
          %p221 = pneg %p62
        $region30: #{tpu_custom_call.1} parent=23 // pred_check_branch
          %223 = sbr.rel (%p221) target = $region32
        $region31: #{tpu_custom_call.1} parent=23 // pred_region
          %p224 = scmp.lt.s32.totalorder %s16, 1
          %s225 = scalar_select %p224, %s16, 1
          %s226 = smul.addr %s225, 2
          %s227 = smul.addr %s226, 4
          %s228 = scalar_lea.vmem %s1, %s227
        $region32: #{tpu_custom_call.1} parent=23 // pred_fallthru
          _
        // Predicated region
        $region33: #{tpu_custom_call.1} parent=23 // pred_check
          %p229 = pneg %p109
        $region34: #{tpu_custom_call.1} parent=23 // pred_check_branch
          %231 = sbr.rel (%p229) target = $region36
        $region35: #{tpu_custom_call.1} parent=23 // pred_region
          %p232 = scmp.lt.s32.totalorder %s16, 1
          %s233 = scalar_select %p232, %s16, 1
          %s234 = smul.addr %s233, 2
          %s235 = smul.addr %s234, 8
          %s236 = scalar_lea.vmem %s3, %s235
        $region36: #{tpu_custom_call.1} parent=23 // pred_fallthru
          _
      $region24: #{tpu_custom_call.1} parent=5 // pred_fallthru
        _
      %p237 = scmp.le.s32.totalorder 1, %s16
      %p238 = scmp.lt.s32.totalorder %s16, 3
      %p239 = pnand %p237, %p238
      %p240 = pneg %p239
      // Predicated region
      $region37: #{tpu_custom_call.1} parent=5 // pred_check
        _
      $region38: #{tpu_custom_call.1} parent=5 // pred_check_branch
        %242 = sbr.rel (%p239) target = $region40
      $region39: #{tpu_custom_call.1} parent=5 // pred_region
        %s243 = ssub.s32 %s16, 1
        %p244 = scmp.lt.s32.totalorder %s21, 1
        %s245 = scalar_select %p244, %s21, 1
        %s246 = smul.addr %s245, 2
        %s247 = smul.addr %s246, 4
        %s248 = scalar_lea.vmem %s0, %s247
        %p249 = pneg %p42
        %p250 = pneg %p39
        %p251 = scmp.lt.s32.totalorder %s21, 1
        %s252 = scalar_select %p251, %s21, 1
        %s253 = smul.addr %s252, 2
        %s254 = smul.addr %s253, 4
        %s255 = scalar_lea.vmem %s1, %s254
        %p256 = pneg %p68
        %p257 = pneg %p65
        %p258 = pneg %p89
        %p259 = pneg %p86
        %p260 = scmp.lt.s32.totalorder %s21, 1
        %s261 = scalar_select %p260, %s21, 1
        %s262 = smul.addr %s261, 2
        %s263 = smul.addr %s262, 8
        %s264 = scalar_lea.vmem %s3, %s263
        %p265 = pneg %p115
        %p266 = pneg %p112
        %p267 = pneg %p136
        %p268 = pneg %p133
        %p269 = pneg %p162
        %p270 = pneg %p159
        %s271 = sand.u32 %s149, 1
        %s272 = scalar_lea.sflag [#allocation3], %s271
        %s273 = sand.u32 %s149, 1
        %s274 = smul.addr %s273, 16
        %s275 = scalar_lea.vmem [#allocation2], %s274
        %p276 = pneg %p188
        %p277 = pneg %p185
        %p278 = scmp.lt.s32.totalorder %s21, 1
        %s279 = scalar_select %p278, %s21, 1
        %s280 = scalar_lea.vmem %s6, %s279
        %p281 = scmp.lt.s32.totalorder %s21, 1
        %s282 = scalar_select %p281, %s21, 1
        %s283 = smul.addr %s282, 2
        %s284 = smul.addr %s283, 4
        %s285 = scalar_lea.vmem %s0, %s284
        %p286 = scmp.lt.s32.totalorder %s21, 1
        %s287 = scalar_select %p286, %s21, 1
        %s288 = smul.addr %s287, 2
        %s289 = smul.addr %s288, 4
        %s290 = scalar_lea.vmem %s1, %s289
        %p291 = scmp.lt.s32.totalorder %s21, 1
        %s292 = scalar_select %p291, %s21, 1
        %s293 = smul.addr %s292, 2
        %s294 = smul.addr %s293, 8
        %s295 = scalar_lea.vmem %s3, %s294
        %p296 = scmp.lt.s32.totalorder %s21, 1
        %s297 = scalar_select %p296, %s21, 1
        %s298 = scalar_lea.vmem %s6, %s297
        %v300 = vld [vmem:[%s285] sm:$0xf]
        %v301 = vld [vmem:[%s285 + $0x4] sm:$0xf]
        %v302 = vld [vmem:[%s290] sm:$0xf]
        %v303 = vld [vmem:[%s290 + $0x4] sm:$0xf]
        %v304 = vld [vmem:[%s2] sm:$0xf]
        %v305 = vld [vmem:[%s2 + $0x4] sm:$0xf]
        %v306 = vld [vmem:[%s2 + $0x8] sm:$0xf]
        %v307 = vld [vmem:[%s2 + $0xc] sm:$0xf]
        %v308 = vld [vmem:[%s2 + $0x10] sm:$0xf]
        %v309 = vld [vmem:[%s2 + $0x14] sm:$0xf]
        %v310 = vld [vmem:[%s2 + $0x18] sm:$0xf]
        %v311 = vld [vmem:[%s2 + $0x1c] sm:$0xf]
        %v312 = vld [vmem:[%s2 + $0x20] sm:$0xf]
        %v313 = vld [vmem:[%s2 + $0x24] sm:$0xf]
        %v314 = vld [vmem:[%s2 + $0x28] sm:$0xf]
        %v315 = vld [vmem:[%s2 + $0x2c] sm:$0xf]
        %v316 = vld [vmem:[%s2 + $0x30] sm:$0xf]
        %v317 = vld [vmem:[%s2 + $0x34] sm:$0xf]
        %v318 = vld [vmem:[%s2 + $0x38] sm:$0xf]
        %v319 = vld [vmem:[%s2 + $0x3c] sm:$0xf]
        %v336 = vunpack.c.l.b16 %v304
        %v337 = vunpack.c.l.b16 %v305
        %v338 = vunpack.c.l.b16 %v306
        %v339 = vunpack.c.l.b16 %v307
        %v340 = vunpack.c.l.b16 %v308
        %v341 = vunpack.c.l.b16 %v309
        %v342 = vunpack.c.l.b16 %v310
        %v343 = vunpack.c.l.b16 %v311
        %v344 = vunpack.c.l.b16 %v312
        %v345 = vunpack.c.l.b16 %v313
        %v346 = vunpack.c.l.b16 %v314
        %v347 = vunpack.c.l.b16 %v315
        %v348 = vunpack.c.l.b16 %v316
        %v349 = vunpack.c.l.b16 %v317
        %v350 = vunpack.c.l.b16 %v318
        %v351 = vunpack.c.l.b16 %v319
        %v352 = vpack.c.b16 %v337, %v336
        %v353 = vpack.c.b16 %v339, %v338
        %v354 = vpack.c.b16 %v341, %v340
        %v355 = vpack.c.b16 %v343, %v342
        %v356 = vpack.c.b16 %v345, %v344
        %v357 = vpack.c.b16 %v347, %v346
        %v358 = vpack.c.b16 %v349, %v348
        %v359 = vpack.c.b16 %v351, %v350
        %v362 = vunpack.c.l.b16 %v300
        %v363 = vunpack.c.l.b16 %v301
        %v364 = vpack.c.b16 %v363, %v362
        %vm366 = vcmask 130048
        %v368 = vsel %vm366, %v352, 0
        %v371 = vsel %vm366, %v353, 0
        %v374 = vsel %vm366, %v354, 0
        %v377 = vsel %vm366, %v355, 0
        %v380 = vsel %vm366, %v356, 0
        %v383 = vsel %vm366, %v357, 0
        %v386 = vsel %vm366, %v358, 0
        %v389 = vsel %vm366, %v359, 0
        %391 = vmatprep.subr.bf16.mxu0 0
        %392 = vmatpush1.bf16.msra.mxu0 %v364
        %393 = vmatprep.subr.bf16.mxu0 0
        %394 = vmatpush1.bf16.msra.mxu0 0
        %395 = vmatprep.subr.bf16.mxu0 0
        %396 = vmatpush1.bf16.msra.mxu0 0
        %397 = vmatprep.subr.bf16.mxu0 0
        %398 = vmatpush1.bf16.msra.mxu0 0
        %399 = vmatprep.subr.bf16.mxu0 0
        %400 = vmatpush1.bf16.msra.mxu0 0
        %401 = vmatprep.subr.bf16.mxu0 0
        %402 = vmatpush1.bf16.msra.mxu0 0
        %403 = vmatprep.subr.bf16.mxu0 0
        %404 = vmatpush1.bf16.msra.mxu0 0
        %405 = vmatprep.subr.bf16.mxu0 0
        %406 = vmatpush1.bf16.msra.mxu0 0
        %407 = vmatprep.subr.bf16.mxu0 0
        %408 = vmatpush1.bf16.msra.mxu0 0
        %409 = vmatprep.subr.bf16.mxu0 0
        %410 = vmatpush1.bf16.msra.mxu0 0
        %411 = vmatprep.subr.bf16.mxu0 0
        %412 = vmatpush1.bf16.msra.mxu0 0
        %413 = vmatprep.subr.bf16.mxu0 0
        %414 = vmatpush1.bf16.msra.mxu0 0
        %415 = vmatprep.subr.bf16.mxu0 0
        %416 = vmatpush1.bf16.msra.mxu0 0
        %417 = vmatprep.subr.bf16.mxu0 0
        %418 = vmatpush1.bf16.msra.mxu0 0
        %419 = vmatprep.subr.bf16.mxu0 0
        %420 = vmatpush1.bf16.msra.mxu0 0
        %421 = vmatprep.subr.bf16.mxu0 0
        %422 = vmatpush1.bf16.msra.mxu0 0
        %423 = vmatprep.mubr.bf16.mxu0 0
        %424 = vmatmul.mubr.bf16.gmra.mrb[0].mxu0 %v368
        %v425 = vpop.f32.mrb[0].mxu0
        %v426 = vadd.f32 0.0, %v425
        %v427 = vpop.f32.mrb[0].mxu0
        %v428 = vpop.f32.mrb[0].mxu0
        %v429 = vadd.f32 0.0, %v428
        %v430 = vpop.f32.mrb[0].mxu0
        %431 = vmatprep.mubr.bf16.mxu0 0
        %432 = vmatmul.mubr.bf16.gmra.mrb[0].mxu0 %v371
        %v433 = vpop.f32.mrb[0].mxu0
        %v434 = vadd.f32 0.0, %v433
        %v435 = vpop.f32.mrb[0].mxu0
        %v436 = vpop.f32.mrb[0].mxu0
        %v437 = vadd.f32 0.0, %v436
        %v438 = vpop.f32.mrb[0].mxu0
        %439 = vmatprep.mubr.bf16.mxu0 0
        %440 = vmatmul.mubr.bf16.gmra.mrb[0].mxu0 %v374
        %v441 = vpop.f32.mrb[0].mxu0
        %v442 = vadd.f32 0.0, %v441
        %v443 = vpop.f32.mrb[0].mxu0
        %v444 = vpop.f32.mrb[0].mxu0
        %v445 = vadd.f32 0.0, %v444
        %v446 = vpop.f32.mrb[0].mxu0
        %447 = vmatprep.mubr.bf16.mxu0 0
        %448 = vmatmul.mubr.bf16.gmra.mrb[0].mxu0 %v377
        %v449 = vpop.f32.mrb[0].mxu0
        %v450 = vadd.f32 0.0, %v449
        %v451 = vpop.f32.mrb[0].mxu0
        %v452 = vpop.f32.mrb[0].mxu0
        %v453 = vadd.f32 0.0, %v452
        %v454 = vpop.f32.mrb[0].mxu0
        %455 = vmatprep.mubr.bf16.mxu0 0
        %456 = vmatmul.mubr.bf16.gmra.mrb[0].mxu0 %v380
        %v457 = vpop.f32.mrb[0].mxu0
        %v458 = vadd.f32 0.0, %v457
        %v459 = vpop.f32.mrb[0].mxu0
        %v460 = vpop.f32.mrb[0].mxu0
        %v461 = vadd.f32 0.0, %v460
        %v462 = vpop.f32.mrb[0].mxu0
        %463 = vmatprep.mubr.bf16.mxu0 0
        %464 = vmatmul.mubr.bf16.gmra.mrb[0].mxu0 %v383
        %v465 = vpop.f32.mrb[0].mxu0
        %v466 = vadd.f32 0.0, %v465
        %v467 = vpop.f32.mrb[0].mxu0
        %v468 = vpop.f32.mrb[0].mxu0
        %v469 = vadd.f32 0.0, %v468
        %v470 = vpop.f32.mrb[0].mxu0
        %471 = vmatprep.mubr.bf16.mxu0 0
        %472 = vmatmul.mubr.bf16.gmra.mrb[0].mxu0 %v386
        %v473 = vpop.f32.mrb[0].mxu0
        %v474 = vadd.f32 0.0, %v473
        %v475 = vpop.f32.mrb[0].mxu0
        %v476 = vpop.f32.mrb[0].mxu0
        %v477 = vadd.f32 0.0, %v476
        %v478 = vpop.f32.mrb[0].mxu0
        %479 = vmatprep.mubr.bf16.mxu0 0
        %480 = vmatmul.mubr.bf16.gmra.mrb[0].mxu0 %v389
        %v481 = vpop.f32.mrb[0].mxu0
        %v482 = vadd.f32 0.0, %v481
        %v483 = vpop.f32.mrb[0].mxu0
        %v484 = vpop.f32.mrb[0].mxu0
        %v485 = vadd.f32 0.0, %v484
        %v486 = vpop.f32.mrb[0].mxu0
        %487 = vdwg.mxu0
        %v488 = vmul.f32 %v426, 0.5
        %v489 = vmul.f32 %v429, 0.5
        %v490 = vmul.f32 %v434, 0.5
        %v491 = vmul.f32 %v437, 0.5
        %v492 = vmul.f32 %v442, 0.5
        %v493 = vmul.f32 %v445, 0.5
        %v494 = vmul.f32 %v450, 0.5
        %v495 = vmul.f32 %v453, 0.5
        %v496 = vmul.f32 %v458, 0.5
        %v497 = vmul.f32 %v461, 0.5
        %v498 = vmul.f32 %v466, 0.5
        %v499 = vmul.f32 %v469, 0.5
        %v500 = vmul.f32 %v474, 0.5
        %v501 = vmul.f32 %v477, 0.5
        %v502 = vmul.f32 %v482, 0.5
        %v503 = vmul.f32 %v485, 0.5
        %v504 = vunpack.c.l.bf16 %v302
        %v505 = vunpack.c.l.bf16 %v303
        %v506 = vmul.f32 %v504, %v504
        %v507 = vmul.f32 %v505, %v505
        %508 = vadd.xlane.f32.xlu0 %v506
        %v509 = vpop.xlane.xlu0 %508
        %510 = vadd.xlane.f32.xlu0 %v507
        %v511 = vpop.xlane.xlu0 %510
        %v512 = vmul.f32 %v488, %v488
        %v513 = vmul.f32 %v489, %v489
        %v514 = vmul.f32 %v490, %v490
        %v515 = vmul.f32 %v491, %v491
        %v516 = vmul.f32 %v492, %v492
        %v517 = vmul.f32 %v493, %v493
        %v518 = vmul.f32 %v494, %v494
        %v519 = vmul.f32 %v495, %v495
        %v520 = vmul.f32 %v496, %v496
        %v521 = vmul.f32 %v497, %v497
        %v522 = vmul.f32 %v498, %v498
        %v523 = vmul.f32 %v499, %v499
        %v524 = vmul.f32 %v500, %v500
        %v525 = vmul.f32 %v501, %v501
        %v526 = vmul.f32 %v502, %v502
        %v527 = vmul.f32 %v503, %v503
        %528 = vadd.xlane.f32.xlu0 %v512
        %v529 = vpop.xlane.xlu0 %528
        %530 = vadd.xlane.f32.xlu0 %v513
        %v531 = vpop.xlane.xlu0 %530
        %532 = vadd.xlane.f32.xlu0 %v514
        %v533 = vpop.xlane.xlu0 %532
        %534 = vadd.xlane.f32.xlu0 %v515
        %v535 = vpop.xlane.xlu0 %534
        %536 = vadd.xlane.f32.xlu0 %v516
        %v537 = vpop.xlane.xlu0 %536
        %538 = vadd.xlane.f32.xlu0 %v517
        %v539 = vpop.xlane.xlu0 %538
        %540 = vadd.xlane.f32.xlu0 %v518
        %v541 = vpop.xlane.xlu0 %540
        %542 = vadd.xlane.f32.xlu0 %v519
        %v543 = vpop.xlane.xlu0 %542
        %544 = vadd.xlane.f32.xlu0 %v520
        %v545 = vpop.xlane.xlu0 %544
        %546 = vadd.xlane.f32.xlu0 %v521
        %v547 = vpop.xlane.xlu0 %546
        %548 = vadd.xlane.f32.xlu0 %v522
        %v549 = vpop.xlane.xlu0 %548
        %550 = vadd.xlane.f32.xlu0 %v523
        %v551 = vpop.xlane.xlu0 %550
        %552 = vadd.xlane.f32.xlu0 %v524
        %v553 = vpop.xlane.xlu0 %552
        %554 = vadd.xlane.f32.xlu0 %v525
        %v555 = vpop.xlane.xlu0 %554
        %556 = vadd.xlane.f32.xlu0 %v526
        %v557 = vpop.xlane.xlu0 %556
        %558 = vadd.xlane.f32.xlu0 %v527
        %v559 = vpop.xlane.xlu0 %558
        %v560 = vpack.c.bf16 %v489, %v488
        %v561 = vpack.c.bf16 %v491, %v490
        %v562 = vpack.c.bf16 %v493, %v492
        %v563 = vpack.c.bf16 %v495, %v494
        %v564 = vpack.c.bf16 %v497, %v496
        %v565 = vpack.c.bf16 %v499, %v498
        %v566 = vpack.c.bf16 %v501, %v500
        %v567 = vpack.c.bf16 %v503, %v502
        %v570 = vunpack.c.l.b16 %v302
        %v571 = vunpack.c.l.b16 %v303
        %v572 = vpack.c.b16 %v571, %v570
        %574 = vmatprep.subr.bf16.mxu0 0
        %575 = vmatpush1.bf16.xpose.msra.mxu0 %v560
        %576 = vmatprep.subr.bf16.mxu0 0
        %577 = vmatpush1.bf16.xpose.msra.mxu0 %v561
        %578 = vmatprep.subr.bf16.mxu0 0
        %579 = vmatpush1.bf16.xpose.msra.mxu0 %v562
        %580 = vmatprep.subr.bf16.mxu0 0
        %581 = vmatpush1.bf16.xpose.msra.mxu0 %v563
        %582 = vmatprep.subr.bf16.mxu0 0
        %583 = vmatpush1.bf16.xpose.msra.mxu0 %v564
        %584 = vmatprep.subr.bf16.mxu0 0
        %585 = vmatpush1.bf16.xpose.msra.mxu0 %v565
        %586 = vmatprep.subr.bf16.mxu0 0
        %587 = vmatpush1.bf16.xpose.msra.mxu0 %v566
        %588 = vmatprep.subr.bf16.mxu0 0
        %589 = vmatpush1.bf16.xpose.msra.mxu0 %v567
        %590 = vmatprep.subr.bf16.mxu0 0
        %591 = vmatpush1.bf16.xpose.msra.mxu0 0
        %592 = vmatprep.subr.bf16.mxu0 0
        %593 = vmatpush1.bf16.xpose.msra.mxu0 0
        %594 = vmatprep.subr.bf16.mxu0 0
        %595 = vmatpush1.bf16.xpose.msra.mxu0 0
        %596 = vmatprep.subr.bf16.mxu0 0
        %597 = vmatpush1.bf16.xpose.msra.mxu0 0
        %598 = vmatprep.subr.bf16.mxu0 0
        %599 = vmatpush1.bf16.xpose.msra.mxu0 0
        %600 = vmatprep.subr.bf16.mxu0 0
        %601 = vmatpush1.bf16.xpose.msra.mxu0 0
        %602 = vmatprep.subr.bf16.mxu0 0
        %603 = vmatpush1.bf16.xpose.msra.mxu0 0
        %604 = vmatprep.subr.bf16.mxu0 0
        %605 = vmatpush1.bf16.xpose.msra.mxu0 0
        %606 = vmatprep.mubr.bf16.mxu0 0
        %607 = vmatmul.mubr.bf16.gmra.mrb[0].mxu0 %v572
        %v608 = vpop.f32.mrb[0].mxu0
        %v609 = vadd.f32 0.0, %v608
        %v610 = vpop.f32.mrb[0].mxu0
        %v611 = vpop.f32.mrb[0].mxu0
        %v612 = vadd.f32 0.0, %v611
        %v613 = vpop.f32.mrb[0].mxu0
        %614 = vdwg.mxu0
        %615 = vxpose.xlu0.b32.start [1/16] %v529, 128
        %616 = vxpose.xlu0.b32.cont [2/16] %v531, 128
        %617 = vxpose.xlu0.b32.cont [3/16] %v533, 128
        %618 = vxpose.xlu0.b32.cont [4/16] %v535, 128
        %619 = vxpose.xlu0.b32.cont [5/16] %v537, 128
        %620 = vxpose.xlu0.b32.cont [6/16] %v539, 128
        %621 = vxpose.xlu0.b32.cont [7/16] %v541, 128
        %622 = vxpose.xlu0.b32.cont [8/16] %v543, 128
        %623 = vxpose.xlu0.b32.cont [9/16] %v545, 128
        %624 = vxpose.xlu0.b32.cont [10/16] %v547, 128
        %625 = vxpose.xlu0.b32.cont [11/16] %v549, 128
        %626 = vxpose.xlu0.b32.cont [12/16] %v551, 128
        %627 = vxpose.xlu0.b32.cont [13/16] %v553, 128
        %628 = vxpose.xlu0.b32.cont [14/16] %v555, 128
        %629 = vxpose.xlu0.b32.cont [15/16] %v557, 128
        %630 = vxpose.xlu0.b32.end [16/16] %v559, 128
        %v631 = vpop.trf.xlu0
        %v632 = vpop.trf.xlu0
        %v633 = vpop.trf.xlu0
        %v634 = vpop.trf.xlu0
        %v635 = vpop.trf.xlu0
        %v636 = vpop.trf.xlu0
        %v637 = vpop.trf.xlu0
        %v638 = vpop.trf.xlu0
        %v639 = vpop.trf.xlu0
        %v640 = vpop.trf.xlu0
        %v641 = vpop.trf.xlu0
        %v642 = vpop.trf.xlu0
        %v643 = vpop.trf.xlu0
        %v644 = vpop.trf.xlu0
        %v645 = vpop.trf.xlu0
        %v646 = vpop.trf.xlu0
        %v647 = vlaneseq
        %v648 = vshrl.u32 %v647, 7
        %v649 = vsub.s32 0, %v648
        %v650 = vrot.slane %v631, %v649
        %v651 = vadd.f32 %v509, %v650
        %v652 = vadd.f32 %v511, %v650
        %v653 = vmul.f32 %v609, 2.0
        %v654 = vmul.f32 %v612, 2.0
        %v655 = vsub.f32 %v651, %v653
        %v656 = vsub.f32 %v652, %v654
        %v657 = vmax.f32 %v655, 0.0
        %v658 = vmax.f32 %v656, 0.0
        %v659 = vrsqrt.pop %v657
        %v660 = vmul.f32 %v657, %v659
        %vm661 = vcmp.eq.f32.partialorder %v657, inf
        %v662 = vsel %vm661, %v657, %v660
        %vm663 = vcmp.eq.f32.partialorder %v657, 0.0
        %v664 = vand.u32 %v657, 2147483648
        %v665 = vsel %vm663, %v664, %v662
        %v666 = vrsqrt.pop %v658
        %v667 = vmul.f32 %v658, %v666
        %vm668 = vcmp.eq.f32.partialorder %v658, inf
        %v669 = vsel %vm668, %v658, %v667
        %vm670 = vcmp.eq.f32.partialorder %v658, 0.0
        %v671 = vand.u32 %v658, 2147483648
        %v672 = vsel %vm670, %v671, %v669
        %v673 = vld [vmem:[%s4] sm:$0x1]
        %v675 = vlaneseq
        %v676 = vshrl.u32 %v675, 7
        %v677 = vsub.s32 0, %v676
        %v678 = vrot.slane %v673, %v677
        %v680 = vsub.f32 %v678, %v665
        %v681 = vsub.f32 %v678, %v672
        %682 = vmax.xlane.f32.xlu0 %v680
        %v683 = vpop.xlane.xlu0 %682
        %684 = vmax.xlane.f32.xlu0 %v681
        %v685 = vpop.xlane.xlu0 %684
        %v686 = vsub.f32 %v680, %v683
        %v687 = vsub.f32 %v681, %v685
        %v688 = vmul.f32 %v686, 1.442695
        %v689 = vpow.pop %v688
        %v690 = vmul.f32 %v687, 1.442695
        %v691 = vpow.pop %v690
        %692 = vadd.xlane.f32.xlu0 %v689
        %v693 = vpop.xlane.xlu0 %692
        %694 = vadd.xlane.f32.xlu0 %v691
        %v695 = vpop.xlane.xlu0 %694
        %v696 = vrcp.pop %v693
        %v697 = vrcp.pop %v695
        %v698 = vmul.f32 %v689, %v696
        %v699 = vmul.f32 %v691, %v697
        %700 = vst [vmem:[%s275] sm:$0xff] %v698
        %701 = vst [vmem:[%s275 + $0x8] sm:$0xff] %v699
        %v702 = vlog2.pop %v693
        %v703 = vmul.f32 %v702, 0.6931472
        %v704 = vlog2.pop %v695
        %v705 = vmul.f32 %v704, 0.6931472
        %v706 = vsub.f32 %v686, %v703
        %v707 = vsub.f32 %v687, %v705
        %v708 = vld [vmem:[%s295] sm:$0xff]
        %v709 = vld [vmem:[%s295 + $0x8] sm:$0xff]
        %v710 = vmul.f32 %v706, %v708
        %v711 = vmul.f32 %v707, %v709
        %v712 = vadd.f32 %v710, %v711
        %713 = vadd.xlane.f32.xlu0 %v712
        %v714 = vpop.xlane.xlu0 %713
        %v715 = vrot.slane %v714, 4
        %v716 = vadd.f32 %v714, %v715
        %v717 = vrot.slane %v716, 2
        %v718 = vadd.f32 %v716, %v717
        %v719 = vrot.slane %v718, 1
        %v720 = vadd.f32 %v718, %v719
        %s721 = vtos %v720
        %s722 = ssub.f32 0.0, %s721
        %s723 = smul.f32 %s722, 0.083333336
        %v724 = vstv %s723
        %vm725 = vcmask 0
        %726 = vst.msk [vmem:[%s298] sm:$0x1] %vm725, %v724
        %s727 = sand.u32 %s149, 1
        %s728 = scalar_lea.sflag [#allocation3], %s727
        %s729 = sand.u32 %s149, 1
        %s730 = smul.addr %s729, 16
        %s731 = scalar_lea.vmem [#allocation2], %s730
        %p732 = scmp.lt.s32.totalorder %s21, 1
        %s733 = scalar_select %p732, %s21, 1
        %s734 = scalar_lea.vmem %s6, %s733
        // Predicated region
        $region41: #{tpu_custom_call.1} parent=39 // pred_check
          %p735 = pneg %p159
        $region42: #{tpu_custom_call.1} parent=39 // pred_check_branch
          %737 = sbr.rel (%p735) target = $region44
        $region43: #{tpu_custom_call.1} parent=39 // pred_region
          %s739 = ssub.s32 256, 256
          %740 = vsyncadd %s728, %s739
          %s741 = smul.addr %s21, 2
          %s742 = smul.addr %s741, 128
          %s743 = scalar_lea.hbm %s5, %s742
          %s744 = sshll.u32 %s731, 4
          %s745 = int_to_ptr.vmem [resolvable:$true] %s744
          %750 = dma.vmem_to_hbm [thread:$0]  %s745, 256, %s743, %s728, 128, 128, 8
        $region44: #{tpu_custom_call.1} parent=39 // pred_fallthru
          _
        // Predicated region
        $region45: #{tpu_custom_call.1} parent=39 // pred_check
          %p751 = pneg %p185
        $region46: #{tpu_custom_call.1} parent=39 // pred_check_branch
          %753 = sbr.rel (%p751) target = $region48
        $region47: #{tpu_custom_call.1} parent=39 // pred_region
          _
        $region48: #{tpu_custom_call.1} parent=39 // pred_fallthru
          _
      $region40: #{tpu_custom_call.1} parent=5 // pred_fallthru
        _
      %p754 = scmp.le.s32.totalorder 2, %s16
      // Predicated region
      $region49: #{tpu_custom_call.1} parent=5 // pred_check
        %p755 = pneg %p754
      $region50: #{tpu_custom_call.1} parent=5 // pred_check_branch
        %757 = sbr.rel (%p755) target = $region52
      $region51: #{tpu_custom_call.1} parent=5 // pred_region
        %s758 = ssub.s32 %s16, 2
        // Predicated region
        $region53: #{tpu_custom_call.1} parent=51 // pred_check
          %p759 = pneg %p165
        $region54: #{tpu_custom_call.1} parent=51 // pred_check_branch
          %761 = sbr.rel (%p759) target = $region56
        $region55: #{tpu_custom_call.1} parent=51 // pred_region
          %s762 = sand.u32 %s150, 1
          %s763 = scalar_lea.sflag [#allocation3], %s762
          %s764 = sand.u32 %s150, 1
          %s765 = smul.addr %s764, 16
          %s766 = scalar_lea.vmem [#allocation2], %s765
          %767 = dma.done %s763, 256
        $region56: #{tpu_custom_call.1} parent=51 // pred_fallthru
          _
        // Predicated region
        $region57: #{tpu_custom_call.1} parent=51 // pred_check
          %p768 = pneg %p191
        $region58: #{tpu_custom_call.1} parent=51 // pred_check_branch
          %770 = sbr.rel (%p768) target = $region60
        $region59: #{tpu_custom_call.1} parent=51 // pred_region
          %p771 = scmp.lt.s32.totalorder %s22, 1
          %s772 = scalar_select %p771, %s22, 1
          %s773 = scalar_lea.vmem %s6, %s772
        $region60: #{tpu_custom_call.1} parent=51 // pred_fallthru
          _
      $region52: #{tpu_custom_call.1} parent=5 // pred_fallthru
        _
    $region6: #{tpu_custom_call.1} parent=1 // loop_footer
      %s20 = sadd.s32 1, %s16
    $region7: #{tpu_custom_call.1} parent=1 // loop_footer_branch
      %15 = sbr.rel target = $region3
    $region8: #{tpu_custom_call.1} parent=1 // loop_exit
      _
    %774 = vsyncpa [#allocation3], 1
    %s775 = scalar_lea.sflag [#allocation3], 1
    %776 = vsyncpa %s775, 1

</llo_original>
